<compile_context>
chip_gen: v7x
topology: tpu7x:2x2x1
jax: 0.10.0
libtpu: 0.0.40
codegen_flags: <defaults>
</compile_context>

<pallas_src>
import jax
import jax.numpy as jnp
from jax.experimental import pallas as pl
from jax.experimental.pallas import tpu as pltpu

INPUT_SIZE = 11    # len(feature_cols)
HIDDEN_SIZE = 64


def rnn_recurrence_kernel(xp_ref, whh_ref, out_ref):
    """xp_ref : (T, Bt, H) bf16 pre-projected inputs (biases already fused);
       whh_ref: (H, H)    bf16 recurrent weight (stored transposed for h @ W);
       out_ref: (Bt, H)   f32 final hidden state h_T."""
    T, Bt, H = xp_ref.shape
    whh = whh_ref[...]                                  # load W_hh into vregs once

    def step(t, h):
        # One MXU push per timestep (bf16 operands, f32 accumulate);
        # add + tanh ride the VPU / EUP.  h carry stays f32.
        acc = jnp.dot(h.astype(jnp.bfloat16), whh,
                      preferred_element_type=jnp.float32)
        return jnp.tanh(xp_ref[t].astype(jnp.float32) + acc)

    unroll = T if T <= 16 else 8                        # partial unroll for long T
    h_T = jax.lax.fori_loop(
        0, T, step, jnp.zeros((Bt, H), jnp.float32), unroll=unroll
    )
    out_ref[...] = h_T


def _choose_batch_tile(B, T, H):
    """Pick a sublane-aligned (bf16 -> multiple of 16) batch tile and padded B."""
    SUB = 16                                            # bf16 sublane packing
    B_pad = ((max(B, SUB) + SUB - 1) // SUB) * SUB

    # Keep the double-buffered bf16 x_proj slab comfortably inside scoped VMEM
    # on every generation (v5e default 16 MiB, v7x physical 64 MiB).
    budget = 12 * 1024 * 1024
    per_row = 2 * T * H * 2                             # double-buffered bf16 bytes / batch row
    bt_cap = max(SUB, (budget // per_row) // SUB * SUB)

    bt = min(B_pad, 256, bt_cap)

    # Prefer >= 2 batch tiles so the "parallel" grid axis can shard across the
    # two TensorCores on v7x (no effect on single-TC chips).
    if B_pad // bt < 2 and B_pad >= 2 * SUB:
        bt = max(SUB, (B_pad // 2) // SUB * SUB)

    B_pad = ((B_pad + bt - 1) // bt) * bt
    return bt, B_pad


def rnn_model_forward(x, params):
    """x: (B, T, I) float32 (batch_first, like PyTorch). Returns (B,) float32."""
    w_ih, w_hh, b_ih, b_hh, w_fc, b_fc = params
    B, T, I = x.shape
    H = w_hh.shape[0]

    # Hoisted, fully parallel input projection for ALL timesteps (one big
    # matmul), biases pre-fused, result time-major and staged in bf16 to halve
    # the HBM round trip into the recurrence kernel.
    fused_bias = (b_ih + b_hh).reshape(1, 1, H)
    x_proj = (jnp.einsum("bti,ih->tbh", x, w_ih) + fused_bias).astype(jnp.bfloat16)

    bt, B_pad = _choose_batch_tile(B, T, H)
    if B_pad != B:
        x_proj = jnp.pad(x_proj, ((0, 0), (0, B_pad - B), (0, 0)))
    nb = B_pad // bt

    whh_bf16 = w_hh.astype(jnp.bfloat16)

    h_T = pl.pallas_call(
        rnn_recurrence_kernel,
        out_shape=jax.ShapeDtypeStruct((B_pad, H), jnp.float32),
        grid_spec=pltpu.PrefetchScalarGridSpec(
            num_scalar_prefetch=0,
            grid=(nb,),
            in_specs=[
                pl.BlockSpec((T, bt, H), lambda b: (0, b, 0)),   # x_proj batch tile
                pl.BlockSpec((H, H), lambda b: (0, 0)),          # W_hh (transposed, bf16)
            ],
            out_specs=pl.BlockSpec((bt, H), lambda b: (b, 0)),   # lane-dense h_T
        ),
        compiler_params=pltpu.CompilerParams(
            dimension_semantics=("parallel",),                   # batch rows independent
            vmem_limit_bytes=32 * 1024 * 1024,
        ),
    )(x_proj, whh_bf16)

    h_T = h_T[:B]                                                # drop batch padding

    # Tiny (B, H) @ (H, 1) GEMV head in plain JAX (keeps the kernel output
    # lane-dense); slice instead of squeeze so shape stays (B,) even for B == 1.
    out = h_T @ w_fc + b_fc                                      # (B, 1)
    return out[:, 0]


def init_params(key, input_size=INPUT_SIZE, hidden_size=HIDDEN_SIZE):
    """Deterministic init mimicking PyTorch's U(-1/sqrt(H), 1/sqrt(H)).
    NOTE: w_ih / w_hh are stored pre-transposed relative to nn.RNN's layout."""
    ks = jax.random.split(key, 6)
    bound = 1.0 / jnp.sqrt(hidden_size)
    w_ih = jax.random.uniform(ks[0], (input_size, hidden_size), jnp.float32, -bound, bound)
    w_hh = jax.random.uniform(ks[1], (hidden_size, hidden_size), jnp.float32, -bound, bound)
    b_ih = jax.random.uniform(ks[2], (1, hidden_size), jnp.float32, -bound, bound)
    b_hh = jax.random.uniform(ks[3], (1, hidden_size), jnp.float32, -bound, bound)
    w_fc = jax.random.uniform(ks[4], (hidden_size, 1), jnp.float32, -bound, bound)
    b_fc = jax.random.uniform(ks[5], (1, 1), jnp.float32, -bound, bound)
    return (w_ih, w_hh, b_ih, b_hh, w_fc, b_fc)


def reference_forward(x, params):
    """Pure-JAX f32 reference of the same forward pass (lax.scan)."""
    w_ih, w_hh, b_ih, b_hh, w_fc, b_fc = params
    B = x.shape[0]
    h0 = jnp.zeros((B, w_hh.shape[0]), jnp.float32)

    def step(h, x_t):
        h_new = jnp.tanh(x_t @ w_ih + b_ih + h @ w_hh + b_hh)
        return h_new, None

    h_T, _ = jax.lax.scan(step, h0, jnp.transpose(x, (1, 0, 2)))
    return (h_T @ w_fc + b_fc)[:, 0]


if __name__ == "__main__":
    key = jax.random.PRNGKey(0)
    k_param, k_x = jax.random.split(key)

    B, T, I = 2, 8, INPUT_SIZE
    params = init_params(k_param)
    x = jax.random.normal(k_x, (B, T, I), jnp.float32)

    out = rnn_model_forward(x, params)
    out = jax.block_until_ready(out)

    ref = reference_forward(x, params)
    assert out.shape == (B,)
    # bf16 staging / bf16 MXU operands -> compare against the f32 reference
    # with a relaxed tolerance.
    assert jnp.allclose(out, ref, atol=5e-2, rtol=5e-2)

    print("KERNEL_OK")
</pallas_src>

<mosaic_0001>
module attributes {stable_mosaic.version = 11 : i64} {
  func.func @rnn_recurrence_kernel(%arg0: i32, %arg1: memref<8x16x64xbf16, #tpu.memory_space<vmem>>, %arg2: memref<64x64xbf16, #tpu.memory_space<vmem>>, %arg3: memref<16x64xf32, #tpu.memory_space<vmem>>) attributes {dimension_semantics = [#tpu.dimension_semantics<parallel>], iteration_bounds = array<i64: 1>, scalar_prefetch = 0 : i64, scratch_operands = 0 : i64, tpu.core_type = #tpu.core_type<tc>, window_params = [{transform_indices = @transform_0, window_bounds = array<i64: 8, 16, 64>}, {pipeline_mode = #tpu.pipeline_mode<synchronous>, transform_indices = @transform_1, window_bounds = array<i64: 64, 64>}, {transform_indices = @transform_2, window_bounds = array<i64: 16, 64>}]} {
    %c0 = arith.constant 0 : index
    %c0_0 = arith.constant 0 : index
    %0 = vector.load %arg2[%c0, %c0_0] : memref<64x64xbf16, #tpu.memory_space<vmem>>, vector<64x64xbf16>
    %cst = arith.constant 0.000000e+00 : f32
    %1 = vector.broadcast %cst : f32 to vector<16x64xf32>
    %c0_i32 = arith.constant 0 : i32
    %2 = arith.truncf %1 : vector<16x64xf32> to vector<16x64xbf16>
    %cst_1 = arith.constant dense<0.000000e+00> : vector<16x64xf32>
    %3 = tpu.matmul %2, %0, %cst_1 {dimension_numbers = #tpu.dot_dimension_numbers<[1], [0], [0], [1], [0, 0, 1, 1], [], []>} : vector<16x64xbf16>, vector<64x64xbf16>, vector<16x64xf32> -> vector<16x64xf32>
    %4 = arith.index_cast %c0_i32 : i32 to index
    %c0_2 = arith.constant 0 : index
    %c0_3 = arith.constant 0 : index
    %5 = vector.load %arg1[%4, %c0_2, %c0_3] : memref<8x16x64xbf16, #tpu.memory_space<vmem>>, vector<1x16x64xbf16>
    %6 = vector.shape_cast %5 : vector<1x16x64xbf16> to vector<16x64xbf16>
    %7 = arith.extf %6 : vector<16x64xbf16> to vector<16x64xf32>
    %8 = arith.addf %7, %3 : vector<16x64xf32>
    %9 = math.tanh %8 : vector<16x64xf32>
    %c1_i32 = arith.constant 1 : i32
    %10 = arith.truncf %9 : vector<16x64xf32> to vector<16x64xbf16>
    %cst_4 = arith.constant dense<0.000000e+00> : vector<16x64xf32>
    %11 = tpu.matmul %10, %0, %cst_4 {dimension_numbers = #tpu.dot_dimension_numbers<[1], [0], [0], [1], [0, 0, 1, 1], [], []>} : vector<16x64xbf16>, vector<64x64xbf16>, vector<16x64xf32> -> vector<16x64xf32>
    %12 = arith.index_cast %c1_i32 : i32 to index
    %c0_5 = arith.constant 0 : index
    %c0_6 = arith.constant 0 : index
    %13 = vector.load %arg1[%12, %c0_5, %c0_6] : memref<8x16x64xbf16, #tpu.memory_space<vmem>>, vector<1x16x64xbf16>
    %14 = vector.shape_cast %13 : vector<1x16x64xbf16> to vector<16x64xbf16>
    %15 = arith.extf %14 : vector<16x64xbf16> to vector<16x64xf32>
    %16 = arith.addf %15, %11 : vector<16x64xf32>
    %17 = math.tanh %16 : vector<16x64xf32>
    %c2_i32 = arith.constant 2 : i32
    %18 = arith.truncf %17 : vector<16x64xf32> to vector<16x64xbf16>
    %cst_7 = arith.constant dense<0.000000e+00> : vector<16x64xf32>
    %19 = tpu.matmul %18, %0, %cst_7 {dimension_numbers = #tpu.dot_dimension_numbers<[1], [0], [0], [1], [0, 0, 1, 1], [], []>} : vector<16x64xbf16>, vector<64x64xbf16>, vector<16x64xf32> -> vector<16x64xf32>
    %20 = arith.index_cast %c2_i32 : i32 to index
    %c0_8 = arith.constant 0 : index
    %c0_9 = arith.constant 0 : index
    %21 = vector.load %arg1[%20, %c0_8, %c0_9] : memref<8x16x64xbf16, #tpu.memory_space<vmem>>, vector<1x16x64xbf16>
    %22 = vector.shape_cast %21 : vector<1x16x64xbf16> to vector<16x64xbf16>
    %23 = arith.extf %22 : vector<16x64xbf16> to vector<16x64xf32>
    %24 = arith.addf %23, %19 : vector<16x64xf32>
    %25 = math.tanh %24 : vector<16x64xf32>
    %c3_i32 = arith.constant 3 : i32
    %26 = arith.truncf %25 : vector<16x64xf32> to vector<16x64xbf16>
    %cst_10 = arith.constant dense<0.000000e+00> : vector<16x64xf32>
    %27 = tpu.matmul %26, %0, %cst_10 {dimension_numbers = #tpu.dot_dimension_numbers<[1], [0], [0], [1], [0, 0, 1, 1], [], []>} : vector<16x64xbf16>, vector<64x64xbf16>, vector<16x64xf32> -> vector<16x64xf32>
    %28 = arith.index_cast %c3_i32 : i32 to index
    %c0_11 = arith.constant 0 : index
    %c0_12 = arith.constant 0 : index
    %29 = vector.load %arg1[%28, %c0_11, %c0_12] : memref<8x16x64xbf16, #tpu.memory_space<vmem>>, vector<1x16x64xbf16>
    %30 = vector.shape_cast %29 : vector<1x16x64xbf16> to vector<16x64xbf16>
    %31 = arith.extf %30 : vector<16x64xbf16> to vector<16x64xf32>
    %32 = arith.addf %31, %27 : vector<16x64xf32>
    %33 = math.tanh %32 : vector<16x64xf32>
    %c4_i32 = arith.constant 4 : i32
    %34 = arith.truncf %33 : vector<16x64xf32> to vector<16x64xbf16>
    %cst_13 = arith.constant dense<0.000000e+00> : vector<16x64xf32>
    %35 = tpu.matmul %34, %0, %cst_13 {dimension_numbers = #tpu.dot_dimension_numbers<[1], [0], [0], [1], [0, 0, 1, 1], [], []>} : vector<16x64xbf16>, vector<64x64xbf16>, vector<16x64xf32> -> vector<16x64xf32>
    %36 = arith.index_cast %c4_i32 : i32 to index
    %c0_14 = arith.constant 0 : index
    %c0_15 = arith.constant 0 : index
    %37 = vector.load %arg1[%36, %c0_14, %c0_15] : memref<8x16x64xbf16, #tpu.memory_space<vmem>>, vector<1x16x64xbf16>
    %38 = vector.shape_cast %37 : vector<1x16x64xbf16> to vector<16x64xbf16>
    %39 = arith.extf %38 : vector<16x64xbf16> to vector<16x64xf32>
    %40 = arith.addf %39, %35 : vector<16x64xf32>
    %41 = math.tanh %40 : vector<16x64xf32>
    %c5_i32 = arith.constant 5 : i32
    %42 = arith.truncf %41 : vector<16x64xf32> to vector<16x64xbf16>
    %cst_16 = arith.constant dense<0.000000e+00> : vector<16x64xf32>
    %43 = tpu.matmul %42, %0, %cst_16 {dimension_numbers = #tpu.dot_dimension_numbers<[1], [0], [0], [1], [0, 0, 1, 1], [], []>} : vector<16x64xbf16>, vector<64x64xbf16>, vector<16x64xf32> -> vector<16x64xf32>
    %44 = arith.index_cast %c5_i32 : i32 to index
    %c0_17 = arith.constant 0 : index
    %c0_18 = arith.constant 0 : index
    %45 = vector.load %arg1[%44, %c0_17, %c0_18] : memref<8x16x64xbf16, #tpu.memory_space<vmem>>, vector<1x16x64xbf16>
    %46 = vector.shape_cast %45 : vector<1x16x64xbf16> to vector<16x64xbf16>
    %47 = arith.extf %46 : vector<16x64xbf16> to vector<16x64xf32>
    %48 = arith.addf %47, %43 : vector<16x64xf32>
    %49 = math.tanh %48 : vector<16x64xf32>
    %c6_i32 = arith.constant 6 : i32
    %50 = arith.truncf %49 : vector<16x64xf32> to vector<16x64xbf16>
    %cst_19 = arith.constant dense<0.000000e+00> : vector<16x64xf32>
    %51 = tpu.matmul %50, %0, %cst_19 {dimension_numbers = #tpu.dot_dimension_numbers<[1], [0], [0], [1], [0, 0, 1, 1], [], []>} : vector<16x64xbf16>, vector<64x64xbf16>, vector<16x64xf32> -> vector<16x64xf32>
    %52 = arith.index_cast %c6_i32 : i32 to index
    %c0_20 = arith.constant 0 : index
    %c0_21 = arith.constant 0 : index
    %53 = vector.load %arg1[%52, %c0_20, %c0_21] : memref<8x16x64xbf16, #tpu.memory_space<vmem>>, vector<1x16x64xbf16>
    %54 = vector.shape_cast %53 : vector<1x16x64xbf16> to vector<16x64xbf16>
    %55 = arith.extf %54 : vector<16x64xbf16> to vector<16x64xf32>
    %56 = arith.addf %55, %51 : vector<16x64xf32>
    %57 = math.tanh %56 : vector<16x64xf32>
    %c7_i32 = arith.constant 7 : i32
    %58 = arith.truncf %57 : vector<16x64xf32> to vector<16x64xbf16>
    %cst_22 = arith.constant dense<0.000000e+00> : vector<16x64xf32>
    %59 = tpu.matmul %58, %0, %cst_22 {dimension_numbers = #tpu.dot_dimension_numbers<[1], [0], [0], [1], [0, 0, 1, 1], [], []>} : vector<16x64xbf16>, vector<64x64xbf16>, vector<16x64xf32> -> vector<16x64xf32>
    %60 = arith.index_cast %c7_i32 : i32 to index
    %c0_23 = arith.constant 0 : index
    %c0_24 = arith.constant 0 : index
    %61 = vector.load %arg1[%60, %c0_23, %c0_24] : memref<8x16x64xbf16, #tpu.memory_space<vmem>>, vector<1x16x64xbf16>
    %62 = vector.shape_cast %61 : vector<1x16x64xbf16> to vector<16x64xbf16>
    %63 = arith.extf %62 : vector<16x64xbf16> to vector<16x64xf32>
    %64 = arith.addf %63, %59 : vector<16x64xf32>
    %65 = math.tanh %64 : vector<16x64xf32>
    %c8_i32 = arith.constant 8 : i32
    %c0_25 = arith.constant 0 : index
    %c0_26 = arith.constant 0 : index
    %66 = vector.load %arg3[%c0_25, %c0_26] : memref<16x64xf32, #tpu.memory_space<vmem>>, vector<16x64xf32>
    tpu.vector_store %arg3[%c0_25, %c0_26], %65 {strides = array<i32>} : memref<16x64xf32, #tpu.memory_space<vmem>>, vector<16x64xf32>,
    return
  }
  func.func @transform_0(%arg0: i32) -> (i32, i32, i32) {
    %c0_i32 = arith.constant 0 : i32
    %c0_i32_0 = arith.constant 0 : i32
    %c0_i32_1 = arith.constant 0 : i32
    return %c0_i32, %arg0, %c0_i32_0 : i32, i32, i32
  }
  func.func @transform_1(%arg0: i32) -> (i32, i32) {
    %c0_i32 = arith.constant 0 : i32
    %c0_i32_0 = arith.constant 0 : i32
    %c0_i32_1 = arith.constant 0 : i32
    return %c0_i32, %c0_i32_0 : i32, i32
  }
  func.func @transform_2(%arg0: i32) -> (i32, i32) {
    %c0_i32 = arith.constant 0 : i32
    %c0_i32_0 = arith.constant 0 : i32
    return %arg0, %c0_i32 : i32, i32
  }
}

</mosaic_0001>

<llo_original>
// kernel: tpu_custom_call.1
$region0: #{tpu_custom_call.1}
  #allocation0 [shape = 'u32[]', space=smem, size = 0x4, offset = 0x4, fixed_abs, tag = 'smem constant byte address 0x4 - core index']
  #allocation1 [shape = 'u32[144,128]{1,0:T(1,128)}', space=vmem, size = 0x12000, scoped, tag = 'internal scratch']
  %s0 = inlined_call_operand.hbm [shape: bf16[8,16,64], index: 0, kind: input, shape index: {}]
  %s1 = inlined_call_operand.hbm [shape: bf16[64,64], index: 1, kind: input, shape index: {}]
  %s2 = inlined_call_operand.hbm [shape: f32[16,64], index: 2, kind: output, shape index: {}]
  %s3 = sld [smem:[#allocation0]]
  $region26: #{tpu_custom_call.1} parent=0
    _
  %s5 = ssub.s32 1, %s3
  %s6 = scalar_select 0, %s5, %s3
  $region1: #{tpu_custom_call.1} parent=0
    #allocation2 [shape = 'u8[32768]{0}', space=vmem, size = 0x8000, scoped, tag = 'input window, operand 0, single buffered']
    #allocation3 [shape = 's32[1]{0}', space=sflag, size = 0x4, scoped, tag = 'scoped memory for tpu_custom_call.1']
    #allocation4 [shape = 's32[1]{0}', space=sflag, size = 0x4, scoped, tag = 'scoped memory for tpu_custom_call.1']
    #allocation5 [shape = 'u8[16384]{0}', space=vmem, size = 0x4000, scoped, tag = 'input window, operand 1, single buffered']
    #allocation6 [shape = 's32[1]{0}', space=sflag, size = 0x4, scoped, tag = 'scoped memory for tpu_custom_call.1']
    #allocation7 [shape = 'u8[8192]{0}', space=vmem, size = 0x2000, scoped, tag = 'output window, operand 0, single buffered']
    %7 = vsyncpa [#allocation3], 0
    %8 = vsyncpa [#allocation6], 0
    %9 = vsyncpa [#allocation4], 0
    // Predicated region
    $region2: #{tpu_custom_call.1} parent=1 // pred_check
      _
    $region3: #{tpu_custom_call.1} parent=1 // pred_check_branch
      %11 = sbr.rel (0) target = $region5
    $region4: #{tpu_custom_call.1} parent=1 // pred_region
      %s13 = ssub.s32 1024, 1024
      %14 = vsyncadd [#allocation3], %s13
      %s15 = sshll.u32 [#allocation2], 4
      %s16 = int_to_ptr.vmem [resolvable:$true] %s15
      %21 = dma.hbm_to_vmem [thread:$0]  %s0, 1024, %s16, [#allocation3], 64, 64, 4
    $region5: #{tpu_custom_call.1} parent=1 // pred_fallthru
      _
    // Predicated region
    $region6: #{tpu_custom_call.1} parent=1 // pred_check
      _
    $region7: #{tpu_custom_call.1} parent=1 // pred_check_branch
      %23 = sbr.rel (0) target = $region9
    $region8: #{tpu_custom_call.1} parent=1 // pred_region
      %s25 = ssub.s32 512, 512
      %26 = vsyncadd [#allocation6], %s25
      %s27 = sshll.u32 [#allocation5], 4
      %s28 = int_to_ptr.vmem [resolvable:$true] %s27
      %33 = dma.hbm_to_vmem [thread:$0]  %s1, 512, %s28, [#allocation6], 64, 64, 4
    $region9: #{tpu_custom_call.1} parent=1 // pred_fallthru
      _
    // Predicated region
    $region10: #{tpu_custom_call.1} parent=1 // pred_check
      _
    $region11: #{tpu_custom_call.1} parent=1 // pred_check_branch
      %35 = sbr.rel (0) target = $region13
    $region12: #{tpu_custom_call.1} parent=1 // pred_region
      %36 = dma.done [#allocation3], 1024
    $region13: #{tpu_custom_call.1} parent=1 // pred_fallthru
      _
    // Predicated region
    $region14: #{tpu_custom_call.1} parent=1 // pred_check
      _
    $region15: #{tpu_custom_call.1} parent=1 // pred_check_branch
      %38 = sbr.rel (0) target = $region17
    $region16: #{tpu_custom_call.1} parent=1 // pred_region
      %39 = dma.done [#allocation6], 512
    $region17: #{tpu_custom_call.1} parent=1 // pred_fallthru
      _
    %v41 = vld [vmem:[#allocation5] sm:$0xf]
    %v42 = vld [vmem:[#allocation5 + $0x4] sm:$0xf]
    %v43 = vld [vmem:[#allocation5 + $0x8] sm:$0xf]
    %v44 = vld [vmem:[#allocation5 + $0xc] sm:$0xf]
    %v45 = vld [vmem:[#allocation5 + $0x10] sm:$0xf]
    %v46 = vld [vmem:[#allocation5 + $0x14] sm:$0xf]
    %v47 = vld [vmem:[#allocation5 + $0x18] sm:$0xf]
    %v48 = vld [vmem:[#allocation5 + $0x1c] sm:$0xf]
    %v57 = vunpack.c.l.b16 %v41
    %v58 = vunpack.c.l.b16 %v42
    %v59 = vunpack.c.l.b16 %v43
    %v60 = vunpack.c.l.b16 %v44
    %v61 = vunpack.c.l.b16 %v45
    %v62 = vunpack.c.l.b16 %v46
    %v63 = vunpack.c.l.b16 %v47
    %v64 = vunpack.c.l.b16 %v48
    %v65 = vpack.c.b16 %v58, %v57
    %v66 = vpack.c.b16 %v60, %v59
    %v67 = vpack.c.b16 %v62, %v61
    %v68 = vpack.c.b16 %v64, %v63
    %vm73 = vcmask 523264
    %v75 = vsel %vm73, 0, 0
    %77 = vmatprep.subr.bf16.mxu0 0
    %78 = vmatpush1.bf16.msra.mxu0 %v65
    %79 = vmatprep.subr.bf16.mxu0 0
    %80 = vmatpush1.bf16.msra.mxu0 %v66
    %81 = vmatprep.subr.bf16.mxu0 0
    %82 = vmatpush1.bf16.msra.mxu0 %v67
    %83 = vmatprep.subr.bf16.mxu0 0
    %84 = vmatpush1.bf16.msra.mxu0 %v68
    %85 = vmatprep.subr.bf16.mxu0 0
    %86 = vmatpush1.bf16.msra.mxu0 0
    %87 = vmatprep.subr.bf16.mxu0 0
    %88 = vmatpush1.bf16.msra.mxu0 0
    %89 = vmatprep.subr.bf16.mxu0 0
    %90 = vmatpush1.bf16.msra.mxu0 0
    %91 = vmatprep.subr.bf16.mxu0 0
    %92 = vmatpush1.bf16.msra.mxu0 0
    %93 = vmatprep.subr.bf16.mxu0 0
    %94 = vmatpush1.bf16.msra.mxu0 0
    %95 = vmatprep.subr.bf16.mxu0 0
    %96 = vmatpush1.bf16.msra.mxu0 0
    %97 = vmatprep.subr.bf16.mxu0 0
    %98 = vmatpush1.bf16.msra.mxu0 0
    %99 = vmatprep.subr.bf16.mxu0 0
    %100 = vmatpush1.bf16.msra.mxu0 0
    %101 = vmatprep.subr.bf16.mxu0 0
    %102 = vmatpush1.bf16.msra.mxu0 0
    %103 = vmatprep.subr.bf16.mxu0 0
    %104 = vmatpush1.bf16.msra.mxu0 0
    %105 = vmatprep.subr.bf16.mxu0 0
    %106 = vmatpush1.bf16.msra.mxu0 0
    %107 = vmatprep.subr.bf16.mxu0 0
    %108 = vmatpush1.bf16.msra.mxu0 0
    %109 = vmatprep.mubr.bf16.mxu0 0
    %110 = vmatmul.mubr.bf16.gmra.mrb[0].mxu0 %v75
    %v111 = vpop.f32.mrb[0].mxu0
    %v112 = vadd.f32 0.0, %v111
    %v113 = vpop.f32.mrb[0].mxu0
    %v114 = vpop.f32.mrb[0].mxu0
    %v115 = vadd.f32 0.0, %v114
    %v116 = vpop.f32.mrb[0].mxu0
    %117 = vdwg.mxu0
    %v118 = vld [vmem:[#allocation2] sm:$0xf]
    %v119 = vld [vmem:[#allocation2 + $0x4] sm:$0xf]
    %v120 = vunpack.c.l.bf16 %v118
    %v121 = vunpack.c.l.bf16 %v119
    %v122 = vadd.f32 %v120, %v112
    %v123 = vadd.f32 %v121, %v115
    %v124 = vtanh.pop %v122
    %v125 = vtanh.pop %v123
    %v126 = vpack.c.bf16 %v125, %v124
    %v128 = vsel %vm73, %v126, 0
    %130 = vmatprep.subr.bf16.mxu0 0
    %131 = vmatpush1.bf16.msra.mxu0 %v65
    %132 = vmatprep.subr.bf16.mxu0 0
    %133 = vmatpush1.bf16.msra.mxu0 %v66
    %134 = vmatprep.subr.bf16.mxu0 0
    %135 = vmatpush1.bf16.msra.mxu0 %v67
    %136 = vmatprep.subr.bf16.mxu0 0
    %137 = vmatpush1.bf16.msra.mxu0 %v68
    %138 = vmatprep.subr.bf16.mxu0 0
    %139 = vmatpush1.bf16.msra.mxu0 0
    %140 = vmatprep.subr.bf16.mxu0 0
    %141 = vmatpush1.bf16.msra.mxu0 0
    %142 = vmatprep.subr.bf16.mxu0 0
    %143 = vmatpush1.bf16.msra.mxu0 0
    %144 = vmatprep.subr.bf16.mxu0 0
    %145 = vmatpush1.bf16.msra.mxu0 0
    %146 = vmatprep.subr.bf16.mxu0 0
    %147 = vmatpush1.bf16.msra.mxu0 0
    %148 = vmatprep.subr.bf16.mxu0 0
    %149 = vmatpush1.bf16.msra.mxu0 0
    %150 = vmatprep.subr.bf16.mxu0 0
    %151 = vmatpush1.bf16.msra.mxu0 0
    %152 = vmatprep.subr.bf16.mxu0 0
    %153 = vmatpush1.bf16.msra.mxu0 0
    %154 = vmatprep.subr.bf16.mxu0 0
    %155 = vmatpush1.bf16.msra.mxu0 0
    %156 = vmatprep.subr.bf16.mxu0 0
    %157 = vmatpush1.bf16.msra.mxu0 0
    %158 = vmatprep.subr.bf16.mxu0 0
    %159 = vmatpush1.bf16.msra.mxu0 0
    %160 = vmatprep.subr.bf16.mxu0 0
    %161 = vmatpush1.bf16.msra.mxu0 0
    %162 = vmatprep.mubr.bf16.mxu0 0
    %163 = vmatmul.mubr.bf16.gmra.mrb[0].mxu0 %v128
    %v164 = vpop.f32.mrb[0].mxu0
    %v165 = vadd.f32 0.0, %v164
    %v166 = vpop.f32.mrb[0].mxu0
    %v167 = vpop.f32.mrb[0].mxu0
    %v168 = vadd.f32 0.0, %v167
    %v169 = vpop.f32.mrb[0].mxu0
    %170 = vdwg.mxu0
    %s171 = scalar_lea.vmem [#allocation2], 8
    %v172 = vld [vmem:[%s171] sm:$0xf]
    %v173 = vld [vmem:[%s171 + $0x4] sm:$0xf]
    %v174 = vunpack.c.l.bf16 %v172
    %v175 = vunpack.c.l.bf16 %v173
    %v176 = vadd.f32 %v174, %v165
    %v177 = vadd.f32 %v175, %v168
    %v178 = vtanh.pop %v176
    %v179 = vtanh.pop %v177
    %v180 = vpack.c.bf16 %v179, %v178
    %v182 = vsel %vm73, %v180, 0
    %184 = vmatprep.subr.bf16.mxu0 0
    %185 = vmatpush1.bf16.msra.mxu0 %v65
    %186 = vmatprep.subr.bf16.mxu0 0
    %187 = vmatpush1.bf16.msra.mxu0 %v66
    %188 = vmatprep.subr.bf16.mxu0 0
    %189 = vmatpush1.bf16.msra.mxu0 %v67
    %190 = vmatprep.subr.bf16.mxu0 0
    %191 = vmatpush1.bf16.msra.mxu0 %v68
    %192 = vmatprep.subr.bf16.mxu0 0
    %193 = vmatpush1.bf16.msra.mxu0 0
    %194 = vmatprep.subr.bf16.mxu0 0
    %195 = vmatpush1.bf16.msra.mxu0 0
    %196 = vmatprep.subr.bf16.mxu0 0
    %197 = vmatpush1.bf16.msra.mxu0 0
    %198 = vmatprep.subr.bf16.mxu0 0
    %199 = vmatpush1.bf16.msra.mxu0 0
    %200 = vmatprep.subr.bf16.mxu0 0
    %201 = vmatpush1.bf16.msra.mxu0 0
    %202 = vmatprep.subr.bf16.mxu0 0
    %203 = vmatpush1.bf16.msra.mxu0 0
    %204 = vmatprep.subr.bf16.mxu0 0
    %205 = vmatpush1.bf16.msra.mxu0 0
    %206 = vmatprep.subr.bf16.mxu0 0
    %207 = vmatpush1.bf16.msra.mxu0 0
    %208 = vmatprep.subr.bf16.mxu0 0
    %209 = vmatpush1.bf16.msra.mxu0 0
    %210 = vmatprep.subr.bf16.mxu0 0
    %211 = vmatpush1.bf16.msra.mxu0 0
    %212 = vmatprep.subr.bf16.mxu0 0
    %213 = vmatpush1.bf16.msra.mxu0 0
    %214 = vmatprep.subr.bf16.mxu0 0
    %215 = vmatpush1.bf16.msra.mxu0 0
    %216 = vmatprep.mubr.bf16.mxu0 0
    %217 = vmatmul.mubr.bf16.gmra.mrb[0].mxu0 %v182
    %v218 = vpop.f32.mrb[0].mxu0
    %v219 = vadd.f32 0.0, %v218
    %v220 = vpop.f32.mrb[0].mxu0
    %v221 = vpop.f32.mrb[0].mxu0
    %v222 = vadd.f32 0.0, %v221
    %v223 = vpop.f32.mrb[0].mxu0
    %224 = vdwg.mxu0
    %s225 = scalar_lea.vmem [#allocation2], 16
    %v226 = vld [vmem:[%s225] sm:$0xf]
    %v227 = vld [vmem:[%s225 + $0x4] sm:$0xf]
    %v228 = vunpack.c.l.bf16 %v226
    %v229 = vunpack.c.l.bf16 %v227
    %v230 = vadd.f32 %v228, %v219
    %v231 = vadd.f32 %v229, %v222
    %v232 = vtanh.pop %v230
    %v233 = vtanh.pop %v231
    %v234 = vpack.c.bf16 %v233, %v232
    %v236 = vsel %vm73, %v234, 0
    %238 = vmatprep.subr.bf16.mxu0 0
    %239 = vmatpush1.bf16.msra.mxu0 %v65
    %240 = vmatprep.subr.bf16.mxu0 0
    %241 = vmatpush1.bf16.msra.mxu0 %v66
    %242 = vmatprep.subr.bf16.mxu0 0
    %243 = vmatpush1.bf16.msra.mxu0 %v67
    %244 = vmatprep.subr.bf16.mxu0 0
    %245 = vmatpush1.bf16.msra.mxu0 %v68
    %246 = vmatprep.subr.bf16.mxu0 0
    %247 = vmatpush1.bf16.msra.mxu0 0
    %248 = vmatprep.subr.bf16.mxu0 0
    %249 = vmatpush1.bf16.msra.mxu0 0
    %250 = vmatprep.subr.bf16.mxu0 0
    %251 = vmatpush1.bf16.msra.mxu0 0
    %252 = vmatprep.subr.bf16.mxu0 0
    %253 = vmatpush1.bf16.msra.mxu0 0
    %254 = vmatprep.subr.bf16.mxu0 0
    %255 = vmatpush1.bf16.msra.mxu0 0
    %256 = vmatprep.subr.bf16.mxu0 0
    %257 = vmatpush1.bf16.msra.mxu0 0
    %258 = vmatprep.subr.bf16.mxu0 0
    %259 = vmatpush1.bf16.msra.mxu0 0
    %260 = vmatprep.subr.bf16.mxu0 0
    %261 = vmatpush1.bf16.msra.mxu0 0
    %262 = vmatprep.subr.bf16.mxu0 0
    %263 = vmatpush1.bf16.msra.mxu0 0
    %264 = vmatprep.subr.bf16.mxu0 0
    %265 = vmatpush1.bf16.msra.mxu0 0
    %266 = vmatprep.subr.bf16.mxu0 0
    %267 = vmatpush1.bf16.msra.mxu0 0
    %268 = vmatprep.subr.bf16.mxu0 0
    %269 = vmatpush1.bf16.msra.mxu0 0
    %270 = vmatprep.mubr.bf16.mxu0 0
    %271 = vmatmul.mubr.bf16.gmra.mrb[0].mxu0 %v236
    %v272 = vpop.f32.mrb[0].mxu0
    %v273 = vadd.f32 0.0, %v272
    %v274 = vpop.f32.mrb[0].mxu0
    %v275 = vpop.f32.mrb[0].mxu0
    %v276 = vadd.f32 0.0, %v275
    %v277 = vpop.f32.mrb[0].mxu0
    %278 = vdwg.mxu0
    %s279 = scalar_lea.vmem [#allocation2], 24
    %v280 = vld [vmem:[%s279] sm:$0xf]
    %v281 = vld [vmem:[%s279 + $0x4] sm:$0xf]
    %v282 = vunpack.c.l.bf16 %v280
    %v283 = vunpack.c.l.bf16 %v281
    %v284 = vadd.f32 %v282, %v273
    %v285 = vadd.f32 %v283, %v276
    %v286 = vtanh.pop %v284
    %v287 = vtanh.pop %v285
    %v288 = vpack.c.bf16 %v287, %v286
    %v290 = vsel %vm73, %v288, 0
    %292 = vmatprep.subr.bf16.mxu0 0
    %293 = vmatpush1.bf16.msra.mxu0 %v65
    %294 = vmatprep.subr.bf16.mxu0 0
    %295 = vmatpush1.bf16.msra.mxu0 %v66
    %296 = vmatprep.subr.bf16.mxu0 0
    %297 = vmatpush1.bf16.msra.mxu0 %v67
    %298 = vmatprep.subr.bf16.mxu0 0
    %299 = vmatpush1.bf16.msra.mxu0 %v68
    %300 = vmatprep.subr.bf16.mxu0 0
    %301 = vmatpush1.bf16.msra.mxu0 0
    %302 = vmatprep.subr.bf16.mxu0 0
    %303 = vmatpush1.bf16.msra.mxu0 0
    %304 = vmatprep.subr.bf16.mxu0 0
    %305 = vmatpush1.bf16.msra.mxu0 0
    %306 = vmatprep.subr.bf16.mxu0 0
    %307 = vmatpush1.bf16.msra.mxu0 0
    %308 = vmatprep.subr.bf16.mxu0 0
    %309 = vmatpush1.bf16.msra.mxu0 0
    %310 = vmatprep.subr.bf16.mxu0 0
    %311 = vmatpush1.bf16.msra.mxu0 0
    %312 = vmatprep.subr.bf16.mxu0 0
    %313 = vmatpush1.bf16.msra.mxu0 0
    %314 = vmatprep.subr.bf16.mxu0 0
    %315 = vmatpush1.bf16.msra.mxu0 0
    %316 = vmatprep.subr.bf16.mxu0 0
    %317 = vmatpush1.bf16.msra.mxu0 0
    %318 = vmatprep.subr.bf16.mxu0 0
    %319 = vmatpush1.bf16.msra.mxu0 0
    %320 = vmatprep.subr.bf16.mxu0 0
    %321 = vmatpush1.bf16.msra.mxu0 0
    %322 = vmatprep.subr.bf16.mxu0 0
    %323 = vmatpush1.bf16.msra.mxu0 0
    %324 = vmatprep.mubr.bf16.mxu0 0
    %325 = vmatmul.mubr.bf16.gmra.mrb[0].mxu0 %v290
    %v326 = vpop.f32.mrb[0].mxu0
    %v327 = vadd.f32 0.0, %v326
    %v328 = vpop.f32.mrb[0].mxu0
    %v329 = vpop.f32.mrb[0].mxu0
    %v330 = vadd.f32 0.0, %v329
    %v331 = vpop.f32.mrb[0].mxu0
    %332 = vdwg.mxu0
    %s333 = scalar_lea.vmem [#allocation2], 32
    %v334 = vld [vmem:[%s333] sm:$0xf]
    %v335 = vld [vmem:[%s333 + $0x4] sm:$0xf]
    %v336 = vunpack.c.l.bf16 %v334
    %v337 = vunpack.c.l.bf16 %v335
    %v338 = vadd.f32 %v336, %v327
    %v339 = vadd.f32 %v337, %v330
    %v340 = vtanh.pop %v338
    %v341 = vtanh.pop %v339
    %v342 = vpack.c.bf16 %v341, %v340
    %v344 = vsel %vm73, %v342, 0
    %346 = vmatprep.subr.bf16.mxu0 0
    %347 = vmatpush1.bf16.msra.mxu0 %v65
    %348 = vmatprep.subr.bf16.mxu0 0
    %349 = vmatpush1.bf16.msra.mxu0 %v66
    %350 = vmatprep.subr.bf16.mxu0 0
    %351 = vmatpush1.bf16.msra.mxu0 %v67
    %352 = vmatprep.subr.bf16.mxu0 0
    %353 = vmatpush1.bf16.msra.mxu0 %v68
    %354 = vmatprep.subr.bf16.mxu0 0
    %355 = vmatpush1.bf16.msra.mxu0 0
    %356 = vmatprep.subr.bf16.mxu0 0
    %357 = vmatpush1.bf16.msra.mxu0 0
    %358 = vmatprep.subr.bf16.mxu0 0
    %359 = vmatpush1.bf16.msra.mxu0 0
    %360 = vmatprep.subr.bf16.mxu0 0
    %361 = vmatpush1.bf16.msra.mxu0 0
    %362 = vmatprep.subr.bf16.mxu0 0
    %363 = vmatpush1.bf16.msra.mxu0 0
    %364 = vmatprep.subr.bf16.mxu0 0
    %365 = vmatpush1.bf16.msra.mxu0 0
    %366 = vmatprep.subr.bf16.mxu0 0
    %367 = vmatpush1.bf16.msra.mxu0 0
    %368 = vmatprep.subr.bf16.mxu0 0
    %369 = vmatpush1.bf16.msra.mxu0 0
    %370 = vmatprep.subr.bf16.mxu0 0
    %371 = vmatpush1.bf16.msra.mxu0 0
    %372 = vmatprep.subr.bf16.mxu0 0
    %373 = vmatpush1.bf16.msra.mxu0 0
    %374 = vmatprep.subr.bf16.mxu0 0
    %375 = vmatpush1.bf16.msra.mxu0 0
    %376 = vmatprep.subr.bf16.mxu0 0
    %377 = vmatpush1.bf16.msra.mxu0 0
    %378 = vmatprep.mubr.bf16.mxu0 0
    %379 = vmatmul.mubr.bf16.gmra.mrb[0].mxu0 %v344
    %v380 = vpop.f32.mrb[0].mxu0
    %v381 = vadd.f32 0.0, %v380
    %v382 = vpop.f32.mrb[0].mxu0
    %v383 = vpop.f32.mrb[0].mxu0
    %v384 = vadd.f32 0.0, %v383
    %v385 = vpop.f32.mrb[0].mxu0
    %386 = vdwg.mxu0
    %s387 = scalar_lea.vmem [#allocation2], 40
    %v388 = vld [vmem:[%s387] sm:$0xf]
    %v389 = vld [vmem:[%s387 + $0x4] sm:$0xf]
    %v390 = vunpack.c.l.bf16 %v388
    %v391 = vunpack.c.l.bf16 %v389
    %v392 = vadd.f32 %v390, %v381
    %v393 = vadd.f32 %v391, %v384
    %v394 = vtanh.pop %v392
    %v395 = vtanh.pop %v393
    %v396 = vpack.c.bf16 %v395, %v394
    %v398 = vsel %vm73, %v396, 0
    %400 = vmatprep.subr.bf16.mxu0 0
    %401 = vmatpush1.bf16.msra.mxu0 %v65
    %402 = vmatprep.subr.bf16.mxu0 0
    %403 = vmatpush1.bf16.msra.mxu0 %v66
    %404 = vmatprep.subr.bf16.mxu0 0
    %405 = vmatpush1.bf16.msra.mxu0 %v67
    %406 = vmatprep.subr.bf16.mxu0 0
    %407 = vmatpush1.bf16.msra.mxu0 %v68
    %408 = vmatprep.subr.bf16.mxu0 0
    %409 = vmatpush1.bf16.msra.mxu0 0
    %410 = vmatprep.subr.bf16.mxu0 0
    %411 = vmatpush1.bf16.msra.mxu0 0
    %412 = vmatprep.subr.bf16.mxu0 0
    %413 = vmatpush1.bf16.msra.mxu0 0
    %414 = vmatprep.subr.bf16.mxu0 0
    %415 = vmatpush1.bf16.msra.mxu0 0
    %416 = vmatprep.subr.bf16.mxu0 0
    %417 = vmatpush1.bf16.msra.mxu0 0
    %418 = vmatprep.subr.bf16.mxu0 0
    %419 = vmatpush1.bf16.msra.mxu0 0
    %420 = vmatprep.subr.bf16.mxu0 0
    %421 = vmatpush1.bf16.msra.mxu0 0
    %422 = vmatprep.subr.bf16.mxu0 0
    %423 = vmatpush1.bf16.msra.mxu0 0
    %424 = vmatprep.subr.bf16.mxu0 0
    %425 = vmatpush1.bf16.msra.mxu0 0
    %426 = vmatprep.subr.bf16.mxu0 0
    %427 = vmatpush1.bf16.msra.mxu0 0
    %428 = vmatprep.subr.bf16.mxu0 0
    %429 = vmatpush1.bf16.msra.mxu0 0
    %430 = vmatprep.subr.bf16.mxu0 0
    %431 = vmatpush1.bf16.msra.mxu0 0
    %432 = vmatprep.mubr.bf16.mxu0 0
    %433 = vmatmul.mubr.bf16.gmra.mrb[0].mxu0 %v398
    %v434 = vpop.f32.mrb[0].mxu0
    %v435 = vadd.f32 0.0, %v434
    %v436 = vpop.f32.mrb[0].mxu0
    %v437 = vpop.f32.mrb[0].mxu0
    %v438 = vadd.f32 0.0, %v437
    %v439 = vpop.f32.mrb[0].mxu0
    %440 = vdwg.mxu0
    %s441 = scalar_lea.vmem [#allocation2], 48
    %v442 = vld [vmem:[%s441] sm:$0xf]
    %v443 = vld [vmem:[%s441 + $0x4] sm:$0xf]
    %v444 = vunpack.c.l.bf16 %v442
    %v445 = vunpack.c.l.bf16 %v443
    %v446 = vadd.f32 %v444, %v435
    %v447 = vadd.f32 %v445, %v438
    %v448 = vtanh.pop %v446
    %v449 = vtanh.pop %v447
    %v450 = vpack.c.bf16 %v449, %v448
    %v452 = vsel %vm73, %v450, 0
    %454 = vmatprep.subr.bf16.mxu0 0
    %455 = vmatpush1.bf16.msra.mxu0 %v65
    %456 = vmatprep.subr.bf16.mxu0 0
    %457 = vmatpush1.bf16.msra.mxu0 %v66
    %458 = vmatprep.subr.bf16.mxu0 0
    %459 = vmatpush1.bf16.msra.mxu0 %v67
    %460 = vmatprep.subr.bf16.mxu0 0
    %461 = vmatpush1.bf16.msra.mxu0 %v68
    %462 = vmatprep.subr.bf16.mxu0 0
    %463 = vmatpush1.bf16.msra.mxu0 0
    %464 = vmatprep.subr.bf16.mxu0 0
    %465 = vmatpush1.bf16.msra.mxu0 0
    %466 = vmatprep.subr.bf16.mxu0 0
    %467 = vmatpush1.bf16.msra.mxu0 0
    %468 = vmatprep.subr.bf16.mxu0 0
    %469 = vmatpush1.bf16.msra.mxu0 0
    %470 = vmatprep.subr.bf16.mxu0 0
    %471 = vmatpush1.bf16.msra.mxu0 0
    %472 = vmatprep.subr.bf16.mxu0 0
    %473 = vmatpush1.bf16.msra.mxu0 0
    %474 = vmatprep.subr.bf16.mxu0 0
    %475 = vmatpush1.bf16.msra.mxu0 0
    %476 = vmatprep.subr.bf16.mxu0 0
    %477 = vmatpush1.bf16.msra.mxu0 0
    %478 = vmatprep.subr.bf16.mxu0 0
    %479 = vmatpush1.bf16.msra.mxu0 0
    %480 = vmatprep.subr.bf16.mxu0 0
    %481 = vmatpush1.bf16.msra.mxu0 0
    %482 = vmatprep.subr.bf16.mxu0 0
    %483 = vmatpush1.bf16.msra.mxu0 0
    %484 = vmatprep.subr.bf16.mxu0 0
    %485 = vmatpush1.bf16.msra.mxu0 0
    %486 = vmatprep.mubr.bf16.mxu0 0
    %487 = vmatmul.mubr.bf16.gmra.mrb[0].mxu0 %v452
    %v488 = vpop.f32.mrb[0].mxu0
    %v489 = vadd.f32 0.0, %v488
    %v490 = vpop.f32.mrb[0].mxu0
    %v491 = vpop.f32.mrb[0].mxu0
    %v492 = vadd.f32 0.0, %v491
    %v493 = vpop.f32.mrb[0].mxu0
    %494 = vdwg.mxu0
    %s495 = scalar_lea.vmem [#allocation2], 56
    %v496 = vld [vmem:[%s495] sm:$0xf]
    %v497 = vld [vmem:[%s495 + $0x4] sm:$0xf]
    %v498 = vunpack.c.l.bf16 %v496
    %v499 = vunpack.c.l.bf16 %v497
    %v500 = vadd.f32 %v498, %v489
    %v501 = vadd.f32 %v499, %v492
    %v502 = vtanh.pop %v500
    %v503 = vtanh.pop %v501
    %504 = vst.msk [vmem:[#allocation7] sm:$0xff] %vm73, %v502
    %505 = vst.msk [vmem:[#allocation7 + $0x8] sm:$0xff] %vm73, %v503
    // Predicated region
    $region18: #{tpu_custom_call.1} parent=1 // pred_check
      _
    $region19: #{tpu_custom_call.1} parent=1 // pred_check_branch
      %507 = sbr.rel (0) target = $region21
    $region20: #{tpu_custom_call.1} parent=1 // pred_region
      %s509 = ssub.s32 256, 256
      %510 = vsyncadd [#allocation4], %s509
      %s511 = sshll.u32 [#allocation7], 4
      %s512 = int_to_ptr.vmem [resolvable:$true] %s511
      %517 = dma.vmem_to_hbm [thread:$0]  %s512, 256, %s2, [#allocation4], 128, 128, 8
    $region21: #{tpu_custom_call.1} parent=1 // pred_fallthru
      _
    // Predicated region
    $region22: #{tpu_custom_call.1} parent=1 // pred_check
      _
    $region23: #{tpu_custom_call.1} parent=1 // pred_check_branch
      %519 = sbr.rel (0) target = $region25
    $region24: #{tpu_custom_call.1} parent=1 // pred_region
      %520 = dma.done [#allocation4], 256
    $region25: #{tpu_custom_call.1} parent=1 // pred_fallthru
      _
    %521 = vsyncpa [#allocation3], 1
    %522 = vsyncpa [#allocation6], 1
    %523 = vsyncpa [#allocation4], 1

</llo_original>
